<compile_context>
chip_gen: v7x
topology: tpu7x:2x2x1
jax: 0.10.0
libtpu: 0.0.40
codegen_flags: <defaults>
</compile_context>

<pallas_src>
import jax
import jax.numpy as jnp
from jax.experimental import pallas as pl
from jax.experimental.pallas import tpu as pltpu

NEG_SLOPE = 0.01  # torch nn.LeakyReLU default
IN_DIM = 72
HID_DIM = 36
OUT_DIM = 1


def _leaky(x):
    return jnp.where(x > 0, x, NEG_SLOPE * x)


def _round_up(x, m):
    return (x + m - 1) // m * m


# ---------------------------------------------------------------------------
# Fused kernel (one batch tile):  out = LeakyReLU(item @ W1 + b1) @ W2 + b2
# ---------------------------------------------------------------------------
def mlp_head_kernel(x_ref, w1_ref, b1_ref, w2_ref, b2_ref, out_ref):
    x = x_ref[...]                                                   # (TB, 72)
    h = jnp.dot(x, w1_ref[...],
                preferred_element_type=jnp.float32,
                precision=jax.lax.Precision.HIGHEST) + b1_ref[...]   # (TB, 36)
    h = _leaky(h)                                                    # f32 VPU
    out_ref[...] = jnp.dot(h, w2_ref[...],
                           preferred_element_type=jnp.float32,
                           precision=jax.lax.Precision.HIGHEST) + b2_ref[...]


def baonet_head(item, w1, b1, w2, b2, *, tb=2048):
    B, _ = item.shape

    # Effective tile: multiple of 8 (f32 sublane), never larger than the
    # (padded) batch so tiny demo batches don't allocate a huge block.
    tb_eff = min(tb, _round_up(B, 8))
    b_pad = _round_up(B, tb_eff)
    if b_pad != B:
        item = jnp.pad(item, ((0, b_pad - B), (0, 0)))
    n_blocks = b_pad // tb_eff

    out = pl.pallas_call(
        mlp_head_kernel,
        out_shape=jax.ShapeDtypeStruct((b_pad, OUT_DIM), jnp.float32),
        grid=(n_blocks,),
        in_specs=[
            # Batch-tiled activations (pipelined HBM->VMEM prefetch).
            pl.BlockSpec((tb_eff, IN_DIM), lambda i: (i, 0)),
            # Weights / biases: full-shape blocks, constant index map ->
            # DMA'd once, resident in VMEM for the whole grid.
            pl.BlockSpec((IN_DIM, HID_DIM), lambda i: (0, 0)),
            pl.BlockSpec((1, HID_DIM), lambda i: (0, 0)),
            pl.BlockSpec((HID_DIM, OUT_DIM), lambda i: (0, 0)),
            pl.BlockSpec((1, OUT_DIM), lambda i: (0, 0)),
        ],
        out_specs=pl.BlockSpec((tb_eff, OUT_DIM), lambda i: (i, 0)),
        compiler_params=pltpu.CompilerParams(
            dimension_semantics=("parallel",),  # 2-TC megacore on v7x
        ),
    )(item, w1, b1, w2, b2)

    # Drop padded tail rows (if any) so padding never reaches the caller.
    return out[:B] if b_pad != B else out


# ---------------------------------------------------------------------------
# Parameter construction (deterministic, synthetic — mimics nn.Linear init).
# Biases are stored pre-reshaped to (1, D) so the jitted forward does no
# layout plumbing around the kernel.
# ---------------------------------------------------------------------------
def init_params(key, in_dim=IN_DIM, hid_dim=HID_DIM, out_dim=OUT_DIM):
    def dense(k, fan_in, fan_out):
        kw, kb = jax.random.split(k)
        scale = 1.0 / jnp.sqrt(jnp.float32(fan_in))
        w = jax.random.uniform(kw, (fan_in, fan_out), jnp.float32, -scale, scale)
        b = jax.random.uniform(kb, (1, fan_out), jnp.float32, -scale, scale)
        return w, b

    k1, k2 = jax.random.split(key)
    return {
        "cn1": dense(k1, in_dim, hid_dim),   # Linear(72, 36)
        "cn2": dense(k2, hid_dim, out_dim),  # Linear(36, 1)
    }


@jax.jit
def baonet_forward(params, item):
    w1, b1 = params["cn1"]
    w2, b2 = params["cn2"]
    return baonet_head(item, w1, b1, w2, b2)


if __name__ == "__main__":
    B = 2  # small demo batch

    key = jax.random.PRNGKey(0)
    k_item, k_param = jax.random.split(key)

    item = jax.random.normal(k_item, (B, IN_DIM), jnp.float32)
    params = init_params(k_param)

    out = baonet_forward(params, item)
    jax.block_until_ready(out)

    assert out.shape == (B, OUT_DIM) and out.dtype == jnp.float32

    # Pure-JAX reference check of the fused kernel (same precision setting).
    w1, b1 = params["cn1"]
    w2, b2 = params["cn2"]
    h_ref = jnp.dot(item, w1, precision=jax.lax.Precision.HIGHEST) + b1
    h_ref = jnp.where(h_ref > 0, h_ref, NEG_SLOPE * h_ref)
    ref = jnp.dot(h_ref, w2, precision=jax.lax.Precision.HIGHEST) + b2
    assert jnp.allclose(out, ref, atol=1e-5, rtol=1e-5)

    print("KERNEL_OK")
</pallas_src>

<mosaic_0001>
module attributes {stable_mosaic.version = 11 : i64} {
  func.func @mlp_head_kernel(%arg0: i32, %arg1: memref<8x72xf32, #tpu.memory_space<vmem>>, %arg2: memref<72x36xf32, #tpu.memory_space<vmem>>, %arg3: memref<1x36xf32, #tpu.memory_space<vmem>>, %arg4: memref<36x1xf32, #tpu.memory_space<vmem>>, %arg5: memref<1x1xf32, #tpu.memory_space<vmem>>, %arg6: memref<8x1xf32, #tpu.memory_space<vmem>>) attributes {dimension_semantics = [#tpu.dimension_semantics<parallel>], iteration_bounds = array<i64: 1>, scalar_prefetch = 0 : i64, scratch_operands = 0 : i64, tpu.core_type = #tpu.core_type<tc>, window_params = [{transform_indices = @transform_0, window_bounds = array<i64: 8, 72>}, {pipeline_mode = #tpu.pipeline_mode<synchronous>, transform_indices = @transform_1, window_bounds = array<i64: 72, 36>}, {pipeline_mode = #tpu.pipeline_mode<synchronous>, transform_indices = @transform_2, window_bounds = array<i64: 1, 36>}, {pipeline_mode = #tpu.pipeline_mode<synchronous>, transform_indices = @transform_3, window_bounds = array<i64: 36, 1>}, {pipeline_mode = #tpu.pipeline_mode<synchronous>, transform_indices = @transform_4, window_bounds = array<i64: 1, 1>}, {transform_indices = @transform_5, window_bounds = array<i64: 8, 1>}]} {
    %c0 = arith.constant 0 : index
    %c0_0 = arith.constant 0 : index
    %0 = vector.load %arg1[%c0, %c0_0] : memref<8x72xf32, #tpu.memory_space<vmem>>, vector<8x72xf32>
    %c0_1 = arith.constant 0 : index
    %c0_2 = arith.constant 0 : index
    %1 = vector.load %arg2[%c0_1, %c0_2] : memref<72x36xf32, #tpu.memory_space<vmem>>, vector<72x36xf32>
    %cst = arith.constant dense<0.000000e+00> : vector<8x36xf32>
    %2 = tpu.matmul %0, %1, %cst {dimension_numbers = #tpu.dot_dimension_numbers<[1], [0], [0], [1], [0, 0, 1, 1], [], []>, precision = #tpu.contract_precision<fp32>} : vector<8x72xf32>, vector<72x36xf32>, vector<8x36xf32> -> vector<8x36xf32>
    %c0_3 = arith.constant 0 : index
    %c0_4 = arith.constant 0 : index
    %3 = vector.load %arg3[%c0_3, %c0_4] : memref<1x36xf32, #tpu.memory_space<vmem>>, vector<1x36xf32>
    %4 = vector.broadcast %3 : vector<1x36xf32> to vector<8x36xf32>
    %5 = arith.addf %2, %4 : vector<8x36xf32>
    %cst_5 = arith.constant 0.000000e+00 : f32
    %6 = vector.broadcast %cst_5 : f32 to vector<8x36xf32>
    %7 = arith.cmpf ogt, %5, %6 : vector<8x36xf32>
    %cst_6 = arith.constant 0.00999999977 : f32
    %8 = vector.broadcast %cst_6 : f32 to vector<8x36xf32>
    %9 = arith.mulf %8, %5 : vector<8x36xf32>
    %10 = arith.select %7, %5, %9 : vector<8x36xi1>, vector<8x36xf32>
    %c0_7 = arith.constant 0 : index
    %c0_8 = arith.constant 0 : index
    %11 = vector.load %arg4[%c0_7, %c0_8] : memref<36x1xf32, #tpu.memory_space<vmem>>, vector<36x1xf32>
    %cst_9 = arith.constant dense<0.000000e+00> : vector<8x1xf32>
    %12 = tpu.matmul %10, %11, %cst_9 {dimension_numbers = #tpu.dot_dimension_numbers<[1], [0], [0], [1], [0, 0, 1, 1], [], []>, precision = #tpu.contract_precision<fp32>} : vector<8x36xf32>, vector<36x1xf32>, vector<8x1xf32> -> vector<8x1xf32>
    %c0_10 = arith.constant 0 : index
    %c0_11 = arith.constant 0 : index
    %13 = vector.load %arg5[%c0_10, %c0_11] : memref<1x1xf32, #tpu.memory_space<vmem>>, vector<1x1xf32>
    %14 = vector.broadcast %13 : vector<1x1xf32> to vector<8x1xf32>
    %15 = arith.addf %12, %14 : vector<8x1xf32>
    %c0_12 = arith.constant 0 : index
    %c0_13 = arith.constant 0 : index
    %16 = vector.load %arg6[%c0_12, %c0_13] : memref<8x1xf32, #tpu.memory_space<vmem>>, vector<8x1xf32>
    tpu.vector_store %arg6[%c0_12, %c0_13], %15 {strides = array<i32>} : memref<8x1xf32, #tpu.memory_space<vmem>>, vector<8x1xf32>,
    return
  }
  func.func @transform_0(%arg0: i32) -> (i32, i32) {
    %c0_i32 = arith.constant 0 : i32
    %c0_i32_0 = arith.constant 0 : i32
    return %arg0, %c0_i32 : i32, i32
  }
  func.func @transform_1(%arg0: i32) -> (i32, i32) {
    %c0_i32 = arith.constant 0 : i32
    %c0_i32_0 = arith.constant 0 : i32
    %c0_i32_1 = arith.constant 0 : i32
    return %c0_i32, %c0_i32_0 : i32, i32
  }
  func.func @transform_2(%arg0: i32) -> (i32, i32) {
    %c0_i32 = arith.constant 0 : i32
    %c0_i32_0 = arith.constant 0 : i32
    %c0_i32_1 = arith.constant 0 : i32
    return %c0_i32, %c0_i32_0 : i32, i32
  }
  func.func @transform_3(%arg0: i32) -> (i32, i32) {
    %c0_i32 = arith.constant 0 : i32
    %c0_i32_0 = arith.constant 0 : i32
    %c0_i32_1 = arith.constant 0 : i32
    return %c0_i32, %c0_i32_0 : i32, i32
  }
  func.func @transform_4(%arg0: i32) -> (i32, i32) {
    %c0_i32 = arith.constant 0 : i32
    %c0_i32_0 = arith.constant 0 : i32
    %c0_i32_1 = arith.constant 0 : i32
    return %c0_i32, %c0_i32_0 : i32, i32
  }
  func.func @transform_5(%arg0: i32) -> (i32, i32) {
    %c0_i32 = arith.constant 0 : i32
    %c0_i32_0 = arith.constant 0 : i32
    return %arg0, %c0_i32 : i32, i32
  }
}

</mosaic_0001>

<llo_original>
// kernel: baonet_forward.1
$region0: #{baonet_forward.1}
  #allocation0 [shape = 'u32[]', space=smem, size = 0x4, offset = 0x4, fixed_abs, tag = 'smem constant byte address 0x4 - core index']
  #allocation1 [shape = 'u32[144,128]{1,0:T(1,128)}', space=vmem, size = 0x12000, scoped, tag = 'internal scratch']
  #allocation2 [shape = 'f32[1,1]{1,0:T(1,128)S(1)}', space=vmem, size = 0x200, scoped, tag = 'scoped memory for baonet_forward.1']
  %s0 = inlined_call_operand.vmem [shape: f32[8,72], index: 0, kind: input, shape index: {}]
  %s1 = inlined_call_operand.vmem [shape: f32[72,36], index: 1, kind: input, shape index: {}]
  %s2 = inlined_call_operand.vmem [shape: f32[1,36], index: 2, kind: input, shape index: {}]
  %s3 = inlined_call_operand.vmem [shape: f32[36,1], index: 3, kind: input, shape index: {}]
  %s4 = inlined_call_operand.<no memory space> [shape: f32[1,1], index: 4, kind: input, shape index: {}]
  %s5 = inlined_call_operand.vmem [shape: f32[8,1], index: 5, kind: output, shape index: {}]
  %s6 = sld [smem:[#allocation0]]
  $region30: #{baonet_forward.1} parent=0
    _
  %s8 = ssub.s32 1, %s6
  %s9 = scalar_select 0, %s8, %s6
  %v10 = vstv %s4
  %11 = vst [vmem:[#allocation2] sm:$0x1] %v10
  // Predicated region
  $region2: #{baonet_forward.1} parent=0 // pred_check
    _
  $region3: #{baonet_forward.1} parent=0 // pred_check_branch
    %13 = sbr.rel (0) target = $region5
  $region4: #{baonet_forward.1} parent=0 // pred_region
    _
  $region5: #{baonet_forward.1} parent=0 // pred_fallthru
    _
  // Predicated region
  $region6: #{baonet_forward.1} parent=0 // pred_check
    _
  $region7: #{baonet_forward.1} parent=0 // pred_check_branch
    %15 = sbr.rel (0) target = $region9
  $region8: #{baonet_forward.1} parent=0 // pred_region
    _
  $region9: #{baonet_forward.1} parent=0 // pred_fallthru
    _
  // Predicated region
  $region10: #{baonet_forward.1} parent=0 // pred_check
    _
  $region11: #{baonet_forward.1} parent=0 // pred_check_branch
    %17 = sbr.rel (0) target = $region13
  $region12: #{baonet_forward.1} parent=0 // pred_region
    _
  $region13: #{baonet_forward.1} parent=0 // pred_fallthru
    _
  // Predicated region
  $region14: #{baonet_forward.1} parent=0 // pred_check
    _
  $region15: #{baonet_forward.1} parent=0 // pred_check_branch
    %19 = sbr.rel (0) target = $region17
  $region16: #{baonet_forward.1} parent=0 // pred_region
    _
  $region17: #{baonet_forward.1} parent=0 // pred_fallthru
    _
  // Predicated region
  $region18: #{baonet_forward.1} parent=0 // pred_check
    _
  $region19: #{baonet_forward.1} parent=0 // pred_check_branch
    %21 = sbr.rel (0) target = $region21
  $region20: #{baonet_forward.1} parent=0 // pred_region
    _
  $region21: #{baonet_forward.1} parent=0 // pred_fallthru
    _
  %v22 = vld [vmem:[%s0] sm:$0xff]
  %v23 = vld [vmem:[%s1] sm:$0xff]
  %v24 = vld [vmem:[%s1 + $0x8] sm:$0xff]
  %v25 = vld [vmem:[%s1 + $0x10] sm:$0xff]
  %v26 = vld [vmem:[%s1 + $0x18] sm:$0xff]
  %v27 = vld [vmem:[%s1 + $0x20] sm:$0xff]
  %v28 = vld [vmem:[%s1 + $0x28] sm:$0xff]
  %v29 = vld [vmem:[%s1 + $0x30] sm:$0xff]
  %v30 = vld [vmem:[%s1 + $0x38] sm:$0xff]
  %v31 = vld [vmem:[%s1 + $0x40] sm:$0xff]
  %v32 = vld [vmem:[%s2] sm:$0x1]
  %v34 = vlaneseq
  %v35 = vshrl.u32 %v34, 7
  %v36 = vsub.s32 0, %v35
  %v37 = vrot.slane %v32, %v36
  %vm39 = vcmask 588800
  %v41 = vsel %vm39, %v22, 0
  %43 = vmatprep.subr.mxu0 0.0
  %v44 = vand.u32 %v23, 4294901760
  %45 = vmatpush1.msra.mxu0 %v44
  %46 = vmatprep.subr.mxu0 0.0
  %v47 = vand.u32 %v24, 4294901760
  %48 = vmatpush1.msra.mxu0 %v47
  %49 = vmatprep.subr.mxu0 0.0
  %v50 = vand.u32 %v25, 4294901760
  %51 = vmatpush1.msra.mxu0 %v50
  %52 = vmatprep.subr.mxu0 0.0
  %v53 = vand.u32 %v26, 4294901760
  %54 = vmatpush1.msra.mxu0 %v53
  %55 = vmatprep.subr.mxu0 0.0
  %v56 = vand.u32 %v27, 4294901760
  %57 = vmatpush1.msra.mxu0 %v56
  %58 = vmatprep.subr.mxu0 0.0
  %v59 = vand.u32 %v28, 4294901760
  %60 = vmatpush1.msra.mxu0 %v59
  %61 = vmatprep.subr.mxu0 0.0
  %v62 = vand.u32 %v29, 4294901760
  %63 = vmatpush1.msra.mxu0 %v62
  %64 = vmatprep.subr.mxu0 0.0
  %v65 = vand.u32 %v30, 4294901760
  %66 = vmatpush1.msra.mxu0 %v65
  %67 = vmatprep.subr.mxu0 0.0
  %v68 = vand.u32 %v31, 4294901760
  %69 = vmatpush1.msra.mxu0 %v68
  %70 = vmatprep.subr.mxu0 0.0
  %71 = vmatpush1.msra.mxu0 0.0
  %72 = vmatprep.subr.mxu0 0.0
  %73 = vmatpush1.msra.mxu0 0.0
  %74 = vmatprep.subr.mxu0 0.0
  %75 = vmatpush1.msra.mxu0 0.0
  %76 = vmatprep.subr.mxu0 0.0
  %77 = vmatpush1.msra.mxu0 0.0
  %78 = vmatprep.subr.mxu0 0.0
  %79 = vmatpush1.msra.mxu0 0.0
  %80 = vmatprep.subr.mxu0 0.0
  %81 = vmatpush1.msra.mxu0 0.0
  %82 = vmatprep.subr.mxu0 0.0
  %83 = vmatpush1.msra.mxu0 0.0
  %84 = vmatprep.subr.mxu0 0.0
  %85 = vmatpush1.msra.mxu0 0.0
  %86 = vmatprep.subr.mxu0 0.0
  %87 = vmatpush1.msra.mxu0 0.0
  %88 = vmatprep.subr.mxu0 0.0
  %89 = vmatpush1.msra.mxu0 0.0
  %90 = vmatprep.subr.mxu0 0.0
  %91 = vmatpush1.msra.mxu0 0.0
  %92 = vmatprep.subr.mxu0 0.0
  %93 = vmatpush1.msra.mxu0 0.0
  %94 = vmatprep.subr.mxu0 0.0
  %95 = vmatpush1.msra.mxu0 0.0
  %96 = vmatprep.subr.mxu0 0.0
  %97 = vmatpush1.msra.mxu0 0.0
  %98 = vmatprep.subr.mxu0 0.0
  %99 = vmatpush1.msra.mxu0 0.0
  %100 = vmatprep.subr.mxu0 0.0
  %101 = vmatpush1.msra.mxu0 0.0
  %102 = vmatprep.subr.mxu0 0.0
  %103 = vmatpush1.msra.mxu0 0.0
  %104 = vmatprep.subr.mxu0 0.0
  %105 = vmatpush1.msra.mxu0 0.0
  %106 = vmatprep.subr.mxu0 0.0
  %107 = vmatpush1.msra.mxu0 0.0
  %108 = vmatprep.subr.mxu0 0.0
  %109 = vmatpush1.msra.mxu0 0.0
  %110 = vmatprep.subr.mxu0 0.0
  %111 = vmatpush1.msra.mxu0 0.0
  %112 = vmatprep.subr.mxu0 0.0
  %113 = vmatpush1.msra.mxu0 0.0
  %114 = vmatprep.subr.mxu0 0.0
  %115 = vmatpush1.msra.mxu0 0.0
  %116 = vmatprep.mubr.f32.mxu0 0.0
  %v117 = vand.u32 %v41, 4294901760
  %v118 = vsub.f32 %v41, %v117
  %v119 = vand.u32 %v118, 4294901760
  %v120 = vsub.f32 %v118, %v119
  %v121 = vand.u32 %v120, 4294901760
  %122 = vmatmul.mubr.f32.gmra.mrb[0].mxu0 %v121
  %v123 = vpop.f32.mrb[0].mxu0
  %v124 = vadd.f32 %v37, %v123
  %v125 = vpop.f32.mrb[0].mxu0
  %126 = vdwg.mxu0
  %127 = vmatprep.subr.mxu0 0.0
  %v128 = vand.u32 %v23, 4294901760
  %v129 = vsub.f32 %v23, %v128
  %v130 = vand.u32 %v129, 4294901760
  %v131 = vsub.f32 %v129, %v130
  %v132 = vand.u32 %v131, 4294901760
  %133 = vmatpush1.msra.mxu0 %v132
  %134 = vmatprep.subr.mxu0 0.0
  %v135 = vand.u32 %v24, 4294901760
  %v136 = vsub.f32 %v24, %v135
  %v137 = vand.u32 %v136, 4294901760
  %v138 = vsub.f32 %v136, %v137
  %v139 = vand.u32 %v138, 4294901760
  %140 = vmatpush1.msra.mxu0 %v139
  %141 = vmatprep.subr.mxu0 0.0
  %v142 = vand.u32 %v25, 4294901760
  %v143 = vsub.f32 %v25, %v142
  %v144 = vand.u32 %v143, 4294901760
  %v145 = vsub.f32 %v143, %v144
  %v146 = vand.u32 %v145, 4294901760
  %147 = vmatpush1.msra.mxu0 %v146
  %148 = vmatprep.subr.mxu0 0.0
  %v149 = vand.u32 %v26, 4294901760
  %v150 = vsub.f32 %v26, %v149
  %v151 = vand.u32 %v150, 4294901760
  %v152 = vsub.f32 %v150, %v151
  %v153 = vand.u32 %v152, 4294901760
  %154 = vmatpush1.msra.mxu0 %v153
  %155 = vmatprep.subr.mxu0 0.0
  %v156 = vand.u32 %v27, 4294901760
  %v157 = vsub.f32 %v27, %v156
  %v158 = vand.u32 %v157, 4294901760
  %v159 = vsub.f32 %v157, %v158
  %v160 = vand.u32 %v159, 4294901760
  %161 = vmatpush1.msra.mxu0 %v160
  %162 = vmatprep.subr.mxu0 0.0
  %v163 = vand.u32 %v28, 4294901760
  %v164 = vsub.f32 %v28, %v163
  %v165 = vand.u32 %v164, 4294901760
  %v166 = vsub.f32 %v164, %v165
  %v167 = vand.u32 %v166, 4294901760
  %168 = vmatpush1.msra.mxu0 %v167
  %169 = vmatprep.subr.mxu0 0.0
  %v170 = vand.u32 %v29, 4294901760
  %v171 = vsub.f32 %v29, %v170
  %v172 = vand.u32 %v171, 4294901760
  %v173 = vsub.f32 %v171, %v172
  %v174 = vand.u32 %v173, 4294901760
  %175 = vmatpush1.msra.mxu0 %v174
  %176 = vmatprep.subr.mxu0 0.0
  %v177 = vand.u32 %v30, 4294901760
  %v178 = vsub.f32 %v30, %v177
  %v179 = vand.u32 %v178, 4294901760
  %v180 = vsub.f32 %v178, %v179
  %v181 = vand.u32 %v180, 4294901760
  %182 = vmatpush1.msra.mxu0 %v181
  %183 = vmatprep.subr.mxu0 0.0
  %v184 = vand.u32 %v31, 4294901760
  %v185 = vsub.f32 %v31, %v184
  %v186 = vand.u32 %v185, 4294901760
  %v187 = vsub.f32 %v185, %v186
  %v188 = vand.u32 %v187, 4294901760
  %189 = vmatpush1.msra.mxu0 %v188
  %190 = vmatprep.subr.mxu0 0.0
  %191 = vmatpush1.msra.mxu0 0.0
  %192 = vmatprep.subr.mxu0 0.0
  %193 = vmatpush1.msra.mxu0 0.0
  %194 = vmatprep.subr.mxu0 0.0
  %195 = vmatpush1.msra.mxu0 0.0
  %196 = vmatprep.subr.mxu0 0.0
  %197 = vmatpush1.msra.mxu0 0.0
  %198 = vmatprep.subr.mxu0 0.0
  %199 = vmatpush1.msra.mxu0 0.0
  %200 = vmatprep.subr.mxu0 0.0
  %201 = vmatpush1.msra.mxu0 0.0
  %202 = vmatprep.subr.mxu0 0.0
  %203 = vmatpush1.msra.mxu0 0.0
  %204 = vmatprep.subr.mxu0 0.0
  %205 = vmatpush1.msra.mxu0 0.0
  %206 = vmatprep.subr.mxu0 0.0
  %207 = vmatpush1.msra.mxu0 0.0
  %208 = vmatprep.subr.mxu0 0.0
  %209 = vmatpush1.msra.mxu0 0.0
  %210 = vmatprep.subr.mxu0 0.0
  %211 = vmatpush1.msra.mxu0 0.0
  %212 = vmatprep.subr.mxu0 0.0
  %213 = vmatpush1.msra.mxu0 0.0
  %214 = vmatprep.subr.mxu0 0.0
  %215 = vmatpush1.msra.mxu0 0.0
  %216 = vmatprep.subr.mxu0 0.0
  %217 = vmatpush1.msra.mxu0 0.0
  %218 = vmatprep.subr.mxu0 0.0
  %219 = vmatpush1.msra.mxu0 0.0
  %220 = vmatprep.subr.mxu0 0.0
  %221 = vmatpush1.msra.mxu0 0.0
  %222 = vmatprep.subr.mxu0 0.0
  %223 = vmatpush1.msra.mxu0 0.0
  %224 = vmatprep.subr.mxu0 0.0
  %225 = vmatpush1.msra.mxu0 0.0
  %226 = vmatprep.subr.mxu0 0.0
  %227 = vmatpush1.msra.mxu0 0.0
  %228 = vmatprep.subr.mxu0 0.0
  %229 = vmatpush1.msra.mxu0 0.0
  %230 = vmatprep.subr.mxu0 0.0
  %231 = vmatpush1.msra.mxu0 0.0
  %232 = vmatprep.subr.mxu0 0.0
  %233 = vmatpush1.msra.mxu0 0.0
  %234 = vmatprep.subr.mxu0 0.0
  %235 = vmatpush1.msra.mxu0 0.0
  %236 = vmatprep.mubr.f32.mxu0 0.0
  %v237 = vand.u32 %v41, 4294901760
  %238 = vmatmul.mubr.f32.gmra.mrb[0].mxu0 %v237
  %v239 = vpop.f32.mrb[0].mxu0
  %v240 = vadd.f32 %v124, %v239
  %v241 = vpop.f32.mrb[0].mxu0
  %242 = vdwg.mxu0
  %243 = vmatprep.subr.mxu0 0.0
  %v244 = vand.u32 %v23, 4294901760
  %v245 = vsub.f32 %v23, %v244
  %246 = vmatpush1.msra.mxu0 %v245
  %247 = vmatprep.subr.mxu0 0.0
  %v248 = vand.u32 %v24, 4294901760
  %v249 = vsub.f32 %v24, %v248
  %250 = vmatpush1.msra.mxu0 %v249
  %251 = vmatprep.subr.mxu0 0.0
  %v252 = vand.u32 %v25, 4294901760
  %v253 = vsub.f32 %v25, %v252
  %254 = vmatpush1.msra.mxu0 %v253
  %255 = vmatprep.subr.mxu0 0.0
  %v256 = vand.u32 %v26, 4294901760
  %v257 = vsub.f32 %v26, %v256
  %258 = vmatpush1.msra.mxu0 %v257
  %259 = vmatprep.subr.mxu0 0.0
  %v260 = vand.u32 %v27, 4294901760
  %v261 = vsub.f32 %v27, %v260
  %262 = vmatpush1.msra.mxu0 %v261
  %263 = vmatprep.subr.mxu0 0.0
  %v264 = vand.u32 %v28, 4294901760
  %v265 = vsub.f32 %v28, %v264
  %266 = vmatpush1.msra.mxu0 %v265
  %267 = vmatprep.subr.mxu0 0.0
  %v268 = vand.u32 %v29, 4294901760
  %v269 = vsub.f32 %v29, %v268
  %270 = vmatpush1.msra.mxu0 %v269
  %271 = vmatprep.subr.mxu0 0.0
  %v272 = vand.u32 %v30, 4294901760
  %v273 = vsub.f32 %v30, %v272
  %274 = vmatpush1.msra.mxu0 %v273
  %275 = vmatprep.subr.mxu0 0.0
  %v276 = vand.u32 %v31, 4294901760
  %v277 = vsub.f32 %v31, %v276
  %278 = vmatpush1.msra.mxu0 %v277
  %279 = vmatprep.subr.mxu0 0.0
  %280 = vmatpush1.msra.mxu0 0.0
  %281 = vmatprep.subr.mxu0 0.0
  %282 = vmatpush1.msra.mxu0 0.0
  %283 = vmatprep.subr.mxu0 0.0
  %284 = vmatpush1.msra.mxu0 0.0
  %285 = vmatprep.subr.mxu0 0.0
  %286 = vmatpush1.msra.mxu0 0.0
  %287 = vmatprep.subr.mxu0 0.0
  %288 = vmatpush1.msra.mxu0 0.0
  %289 = vmatprep.subr.mxu0 0.0
  %290 = vmatpush1.msra.mxu0 0.0
  %291 = vmatprep.subr.mxu0 0.0
  %292 = vmatpush1.msra.mxu0 0.0
  %293 = vmatprep.subr.mxu0 0.0
  %294 = vmatpush1.msra.mxu0 0.0
  %295 = vmatprep.subr.mxu0 0.0
  %296 = vmatpush1.msra.mxu0 0.0
  %297 = vmatprep.subr.mxu0 0.0
  %298 = vmatpush1.msra.mxu0 0.0
  %299 = vmatprep.subr.mxu0 0.0
  %300 = vmatpush1.msra.mxu0 0.0
  %301 = vmatprep.subr.mxu0 0.0
  %302 = vmatpush1.msra.mxu0 0.0
  %303 = vmatprep.subr.mxu0 0.0
  %304 = vmatpush1.msra.mxu0 0.0
  %305 = vmatprep.subr.mxu0 0.0
  %306 = vmatpush1.msra.mxu0 0.0
  %307 = vmatprep.subr.mxu0 0.0
  %308 = vmatpush1.msra.mxu0 0.0
  %309 = vmatprep.subr.mxu0 0.0
  %310 = vmatpush1.msra.mxu0 0.0
  %311 = vmatprep.subr.mxu0 0.0
  %312 = vmatpush1.msra.mxu0 0.0
  %313 = vmatprep.subr.mxu0 0.0
  %314 = vmatpush1.msra.mxu0 0.0
  %315 = vmatprep.subr.mxu0 0.0
  %316 = vmatpush1.msra.mxu0 0.0
  %317 = vmatprep.subr.mxu0 0.0
  %318 = vmatpush1.msra.mxu0 0.0
  %319 = vmatprep.subr.mxu0 0.0
  %320 = vmatpush1.msra.mxu0 0.0
  %321 = vmatprep.subr.mxu0 0.0
  %322 = vmatpush1.msra.mxu0 0.0
  %323 = vmatprep.subr.mxu0 0.0
  %324 = vmatpush1.msra.mxu0 0.0
  %325 = vmatprep.mubr.f32.mxu0 0.0
  %v326 = vand.u32 %v41, 4294901760
  %v327 = vsub.f32 %v41, %v326
  %328 = vmatmul.mubr.f32.gmra.mrb[0].mxu0 %v327
  %v329 = vpop.f32.mrb[0].mxu0
  %v330 = vadd.f32 %v240, %v329
  %v331 = vpop.f32.mrb[0].mxu0
  %332 = vdwg.mxu0
  %333 = vmatprep.subr.mxu0 0.0
  %v334 = vand.u32 %v23, 4294901760
  %335 = vmatpush1.msra.mxu0 %v334
  %336 = vmatprep.subr.mxu0 0.0
  %v337 = vand.u32 %v24, 4294901760
  %338 = vmatpush1.msra.mxu0 %v337
  %339 = vmatprep.subr.mxu0 0.0
  %v340 = vand.u32 %v25, 4294901760
  %341 = vmatpush1.msra.mxu0 %v340
  %342 = vmatprep.subr.mxu0 0.0
  %v343 = vand.u32 %v26, 4294901760
  %344 = vmatpush1.msra.mxu0 %v343
  %345 = vmatprep.subr.mxu0 0.0
  %v346 = vand.u32 %v27, 4294901760
  %347 = vmatpush1.msra.mxu0 %v346
  %348 = vmatprep.subr.mxu0 0.0
  %v349 = vand.u32 %v28, 4294901760
  %350 = vmatpush1.msra.mxu0 %v349
  %351 = vmatprep.subr.mxu0 0.0
  %v352 = vand.u32 %v29, 4294901760
  %353 = vmatpush1.msra.mxu0 %v352
  %354 = vmatprep.subr.mxu0 0.0
  %v355 = vand.u32 %v30, 4294901760
  %356 = vmatpush1.msra.mxu0 %v355
  %357 = vmatprep.subr.mxu0 0.0
  %v358 = vand.u32 %v31, 4294901760
  %359 = vmatpush1.msra.mxu0 %v358
  %360 = vmatprep.subr.mxu0 0.0
  %361 = vmatpush1.msra.mxu0 0.0
  %362 = vmatprep.subr.mxu0 0.0
  %363 = vmatpush1.msra.mxu0 0.0
  %364 = vmatprep.subr.mxu0 0.0
  %365 = vmatpush1.msra.mxu0 0.0
  %366 = vmatprep.subr.mxu0 0.0
  %367 = vmatpush1.msra.mxu0 0.0
  %368 = vmatprep.subr.mxu0 0.0
  %369 = vmatpush1.msra.mxu0 0.0
  %370 = vmatprep.subr.mxu0 0.0
  %371 = vmatpush1.msra.mxu0 0.0
  %372 = vmatprep.subr.mxu0 0.0
  %373 = vmatpush1.msra.mxu0 0.0
  %374 = vmatprep.subr.mxu0 0.0
  %375 = vmatpush1.msra.mxu0 0.0
  %376 = vmatprep.subr.mxu0 0.0
  %377 = vmatpush1.msra.mxu0 0.0
  %378 = vmatprep.subr.mxu0 0.0
  %379 = vmatpush1.msra.mxu0 0.0
  %380 = vmatprep.subr.mxu0 0.0
  %381 = vmatpush1.msra.mxu0 0.0
  %382 = vmatprep.subr.mxu0 0.0
  %383 = vmatpush1.msra.mxu0 0.0
  %384 = vmatprep.subr.mxu0 0.0
  %385 = vmatpush1.msra.mxu0 0.0
  %386 = vmatprep.subr.mxu0 0.0
  %387 = vmatpush1.msra.mxu0 0.0
  %388 = vmatprep.subr.mxu0 0.0
  %389 = vmatpush1.msra.mxu0 0.0
  %390 = vmatprep.subr.mxu0 0.0
  %391 = vmatpush1.msra.mxu0 0.0
  %392 = vmatprep.subr.mxu0 0.0
  %393 = vmatpush1.msra.mxu0 0.0
  %394 = vmatprep.subr.mxu0 0.0
  %395 = vmatpush1.msra.mxu0 0.0
  %396 = vmatprep.subr.mxu0 0.0
  %397 = vmatpush1.msra.mxu0 0.0
  %398 = vmatprep.subr.mxu0 0.0
  %399 = vmatpush1.msra.mxu0 0.0
  %400 = vmatprep.subr.mxu0 0.0
  %401 = vmatpush1.msra.mxu0 0.0
  %402 = vmatprep.subr.mxu0 0.0
  %403 = vmatpush1.msra.mxu0 0.0
  %404 = vmatprep.subr.mxu0 0.0
  %405 = vmatpush1.msra.mxu0 0.0
  %406 = vmatprep.mubr.f32.mxu0 0.0
  %v407 = vand.u32 %v41, 4294901760
  %v408 = vsub.f32 %v41, %v407
  %v409 = vand.u32 %v408, 4294901760
  %410 = vmatmul.mubr.f32.gmra.mrb[0].mxu0 %v409
  %v411 = vpop.f32.mrb[0].mxu0
  %v412 = vadd.f32 %v330, %v411
  %v413 = vpop.f32.mrb[0].mxu0
  %414 = vdwg.mxu0
  %415 = vmatprep.subr.mxu0 0.0
  %v416 = vand.u32 %v23, 4294901760
  %v417 = vsub.f32 %v23, %v416
  %v418 = vand.u32 %v417, 4294901760
  %419 = vmatpush1.msra.mxu0 %v418
  %420 = vmatprep.subr.mxu0 0.0
  %v421 = vand.u32 %v24, 4294901760
  %v422 = vsub.f32 %v24, %v421
  %v423 = vand.u32 %v422, 4294901760
  %424 = vmatpush1.msra.mxu0 %v423
  %425 = vmatprep.subr.mxu0 0.0
  %v426 = vand.u32 %v25, 4294901760
  %v427 = vsub.f32 %v25, %v426
  %v428 = vand.u32 %v427, 4294901760
  %429 = vmatpush1.msra.mxu0 %v428
  %430 = vmatprep.subr.mxu0 0.0
  %v431 = vand.u32 %v26, 4294901760
  %v432 = vsub.f32 %v26, %v431
  %v433 = vand.u32 %v432, 4294901760
  %434 = vmatpush1.msra.mxu0 %v433
  %435 = vmatprep.subr.mxu0 0.0
  %v436 = vand.u32 %v27, 4294901760
  %v437 = vsub.f32 %v27, %v436
  %v438 = vand.u32 %v437, 4294901760
  %439 = vmatpush1.msra.mxu0 %v438
  %440 = vmatprep.subr.mxu0 0.0
  %v441 = vand.u32 %v28, 4294901760
  %v442 = vsub.f32 %v28, %v441
  %v443 = vand.u32 %v442, 4294901760
  %444 = vmatpush1.msra.mxu0 %v443
  %445 = vmatprep.subr.mxu0 0.0
  %v446 = vand.u32 %v29, 4294901760
  %v447 = vsub.f32 %v29, %v446
  %v448 = vand.u32 %v447, 4294901760
  %449 = vmatpush1.msra.mxu0 %v448
  %450 = vmatprep.subr.mxu0 0.0
  %v451 = vand.u32 %v30, 4294901760
  %v452 = vsub.f32 %v30, %v451
  %v453 = vand.u32 %v452, 4294901760
  %454 = vmatpush1.msra.mxu0 %v453
  %455 = vmatprep.subr.mxu0 0.0
  %v456 = vand.u32 %v31, 4294901760
  %v457 = vsub.f32 %v31, %v456
  %v458 = vand.u32 %v457, 4294901760
  %459 = vmatpush1.msra.mxu0 %v458
  %460 = vmatprep.subr.mxu0 0.0
  %461 = vmatpush1.msra.mxu0 0.0
  %462 = vmatprep.subr.mxu0 0.0
  %463 = vmatpush1.msra.mxu0 0.0
  %464 = vmatprep.subr.mxu0 0.0
  %465 = vmatpush1.msra.mxu0 0.0
  %466 = vmatprep.subr.mxu0 0.0
  %467 = vmatpush1.msra.mxu0 0.0
  %468 = vmatprep.subr.mxu0 0.0
  %469 = vmatpush1.msra.mxu0 0.0
  %470 = vmatprep.subr.mxu0 0.0
  %471 = vmatpush1.msra.mxu0 0.0
  %472 = vmatprep.subr.mxu0 0.0
  %473 = vmatpush1.msra.mxu0 0.0
  %474 = vmatprep.subr.mxu0 0.0
  %475 = vmatpush1.msra.mxu0 0.0
  %476 = vmatprep.subr.mxu0 0.0
  %477 = vmatpush1.msra.mxu0 0.0
  %478 = vmatprep.subr.mxu0 0.0
  %479 = vmatpush1.msra.mxu0 0.0
  %480 = vmatprep.subr.mxu0 0.0
  %481 = vmatpush1.msra.mxu0 0.0
  %482 = vmatprep.subr.mxu0 0.0
  %483 = vmatpush1.msra.mxu0 0.0
  %484 = vmatprep.subr.mxu0 0.0
  %485 = vmatpush1.msra.mxu0 0.0
  %486 = vmatprep.subr.mxu0 0.0
  %487 = vmatpush1.msra.mxu0 0.0
  %488 = vmatprep.subr.mxu0 0.0
  %489 = vmatpush1.msra.mxu0 0.0
  %490 = vmatprep.subr.mxu0 0.0
  %491 = vmatpush1.msra.mxu0 0.0
  %492 = vmatprep.subr.mxu0 0.0
  %493 = vmatpush1.msra.mxu0 0.0
  %494 = vmatprep.subr.mxu0 0.0
  %495 = vmatpush1.msra.mxu0 0.0
  %496 = vmatprep.subr.mxu0 0.0
  %497 = vmatpush1.msra.mxu0 0.0
  %498 = vmatprep.subr.mxu0 0.0
  %499 = vmatpush1.msra.mxu0 0.0
  %500 = vmatprep.subr.mxu0 0.0
  %501 = vmatpush1.msra.mxu0 0.0
  %502 = vmatprep.subr.mxu0 0.0
  %503 = vmatpush1.msra.mxu0 0.0
  %504 = vmatprep.subr.mxu0 0.0
  %505 = vmatpush1.msra.mxu0 0.0
  %506 = vmatprep.mubr.f32.mxu0 0.0
  %v507 = vand.u32 %v41, 4294901760
  %508 = vmatmul.mubr.f32.gmra.mrb[0].mxu0 %v507
  %v509 = vpop.f32.mrb[0].mxu0
  %v510 = vadd.f32 %v412, %v509
  %v511 = vpop.f32.mrb[0].mxu0
  %512 = vdwg.mxu0
  %513 = vmatprep.subr.mxu0 0.0
  %v514 = vand.u32 %v23, 4294901760
  %515 = vmatpush1.msra.mxu0 %v514
  %516 = vmatprep.subr.mxu0 0.0
  %v517 = vand.u32 %v24, 4294901760
  %518 = vmatpush1.msra.mxu0 %v517
  %519 = vmatprep.subr.mxu0 0.0
  %v520 = vand.u32 %v25, 4294901760
  %521 = vmatpush1.msra.mxu0 %v520
  %522 = vmatprep.subr.mxu0 0.0
  %v523 = vand.u32 %v26, 4294901760
  %524 = vmatpush1.msra.mxu0 %v523
  %525 = vmatprep.subr.mxu0 0.0
  %v526 = vand.u32 %v27, 4294901760
  %527 = vmatpush1.msra.mxu0 %v526
  %528 = vmatprep.subr.mxu0 0.0
  %v529 = vand.u32 %v28, 4294901760
  %530 = vmatpush1.msra.mxu0 %v529
  %531 = vmatprep.subr.mxu0 0.0
  %v532 = vand.u32 %v29, 4294901760
  %533 = vmatpush1.msra.mxu0 %v532
  %534 = vmatprep.subr.mxu0 0.0
  %v535 = vand.u32 %v30, 4294901760
  %536 = vmatpush1.msra.mxu0 %v535
  %537 = vmatprep.subr.mxu0 0.0
  %v538 = vand.u32 %v31, 4294901760
  %539 = vmatpush1.msra.mxu0 %v538
  %540 = vmatprep.subr.mxu0 0.0
  %541 = vmatpush1.msra.mxu0 0.0
  %542 = vmatprep.subr.mxu0 0.0
  %543 = vmatpush1.msra.mxu0 0.0
  %544 = vmatprep.subr.mxu0 0.0
  %545 = vmatpush1.msra.mxu0 0.0
  %546 = vmatprep.subr.mxu0 0.0
  %547 = vmatpush1.msra.mxu0 0.0
  %548 = vmatprep.subr.mxu0 0.0
  %549 = vmatpush1.msra.mxu0 0.0
  %550 = vmatprep.subr.mxu0 0.0
  %551 = vmatpush1.msra.mxu0 0.0
  %552 = vmatprep.subr.mxu0 0.0
  %553 = vmatpush1.msra.mxu0 0.0
  %554 = vmatprep.subr.mxu0 0.0
  %555 = vmatpush1.msra.mxu0 0.0
  %556 = vmatprep.subr.mxu0 0.0
  %557 = vmatpush1.msra.mxu0 0.0
  %558 = vmatprep.subr.mxu0 0.0
  %559 = vmatpush1.msra.mxu0 0.0
  %560 = vmatprep.subr.mxu0 0.0
  %561 = vmatpush1.msra.mxu0 0.0
  %562 = vmatprep.subr.mxu0 0.0
  %563 = vmatpush1.msra.mxu0 0.0
  %564 = vmatprep.subr.mxu0 0.0
  %565 = vmatpush1.msra.mxu0 0.0
  %566 = vmatprep.subr.mxu0 0.0
  %567 = vmatpush1.msra.mxu0 0.0
  %568 = vmatprep.subr.mxu0 0.0
  %569 = vmatpush1.msra.mxu0 0.0
  %570 = vmatprep.subr.mxu0 0.0
  %571 = vmatpush1.msra.mxu0 0.0
  %572 = vmatprep.subr.mxu0 0.0
  %573 = vmatpush1.msra.mxu0 0.0
  %574 = vmatprep.subr.mxu0 0.0
  %575 = vmatpush1.msra.mxu0 0.0
  %576 = vmatprep.subr.mxu0 0.0
  %577 = vmatpush1.msra.mxu0 0.0
  %578 = vmatprep.subr.mxu0 0.0
  %579 = vmatpush1.msra.mxu0 0.0
  %580 = vmatprep.subr.mxu0 0.0
  %581 = vmatpush1.msra.mxu0 0.0
  %582 = vmatprep.subr.mxu0 0.0
  %583 = vmatpush1.msra.mxu0 0.0
  %584 = vmatprep.subr.mxu0 0.0
  %585 = vmatpush1.msra.mxu0 0.0
  %586 = vmatprep.mubr.f32.mxu0 0.0
  %v587 = vand.u32 %v41, 4294901760
  %588 = vmatmul.mubr.f32.gmra.mrb[0].mxu0 %v587
  %v589 = vpop.f32.mrb[0].mxu0
  %v590 = vadd.f32 %v510, %v589
  %v591 = vpop.f32.mrb[0].mxu0
  %592 = vdwg.mxu0
  %vm593 = vcmp.gt.f32.partialorder %v590, 0.0
  %v594 = vmul.f32 %v590, 0.01
  %v595 = vsel %vm593, %v590, %v594
  %v596 = vld [vmem:[%s3] sm:$0xff]
  %v597 = vld [vmem:[%s3 + $0x8] sm:$0xff]
  %v598 = vld [vmem:[%s3 + $0x10] sm:$0xff]
  %v599 = vld [vmem:[%s3 + $0x18] sm:$0xff]
  %v600 = vld [vmem:[%s3 + $0x20] sm:$0xf]
  %v601 = vld [vmem:[#allocation2] sm:$0x1]
  %v603 = vlaneseq
  %v604 = vshrl.u32 %v603, 7
  %v605 = vsub.s32 0, %v604
  %v606 = vrot.slane %v601, %v605
  %vm608 = vcmask 293888
  %v610 = vsel %vm608, %v595, 0
  %vm612 = vcmask 1043456
  %v614 = vsel %vm612, %v600, 0
  %616 = vmatprep.subr.mxu0 0.0
  %v617 = vand.u32 %v596, 4294901760
  %618 = vmatpush1.msra.mxu0 %v617
  %619 = vmatprep.subr.mxu0 0.0
  %v620 = vand.u32 %v597, 4294901760
  %621 = vmatpush1.msra.mxu0 %v620
  %622 = vmatprep.subr.mxu0 0.0
  %v623 = vand.u32 %v598, 4294901760
  %624 = vmatpush1.msra.mxu0 %v623
  %625 = vmatprep.subr.mxu0 0.0
  %v626 = vand.u32 %v599, 4294901760
  %627 = vmatpush1.msra.mxu0 %v626
  %628 = vmatprep.subr.mxu0 0.0
  %v629 = vand.u32 %v614, 4294901760
  %630 = vmatpush1.msra.mxu0 %v629
  %631 = vmatprep.subr.mxu0 0.0
  %632 = vmatpush1.msra.mxu0 0.0
  %633 = vmatprep.subr.mxu0 0.0
  %634 = vmatpush1.msra.mxu0 0.0
  %635 = vmatprep.subr.mxu0 0.0
  %636 = vmatpush1.msra.mxu0 0.0
  %637 = vmatprep.subr.mxu0 0.0
  %638 = vmatpush1.msra.mxu0 0.0
  %639 = vmatprep.subr.mxu0 0.0
  %640 = vmatpush1.msra.mxu0 0.0
  %641 = vmatprep.subr.mxu0 0.0
  %642 = vmatpush1.msra.mxu0 0.0
  %643 = vmatprep.subr.mxu0 0.0
  %644 = vmatpush1.msra.mxu0 0.0
  %645 = vmatprep.subr.mxu0 0.0
  %646 = vmatpush1.msra.mxu0 0.0
  %647 = vmatprep.subr.mxu0 0.0
  %648 = vmatpush1.msra.mxu0 0.0
  %649 = vmatprep.subr.mxu0 0.0
  %650 = vmatpush1.msra.mxu0 0.0
  %651 = vmatprep.subr.mxu0 0.0
  %652 = vmatpush1.msra.mxu0 0.0
  %653 = vmatprep.subr.mxu0 0.0
  %654 = vmatpush1.msra.mxu0 0.0
  %655 = vmatprep.subr.mxu0 0.0
  %656 = vmatpush1.msra.mxu0 0.0
  %657 = vmatprep.subr.mxu0 0.0
  %658 = vmatpush1.msra.mxu0 0.0
  %659 = vmatprep.subr.mxu0 0.0
  %660 = vmatpush1.msra.mxu0 0.0
  %661 = vmatprep.subr.mxu0 0.0
  %662 = vmatpush1.msra.mxu0 0.0
  %663 = vmatprep.subr.mxu0 0.0
  %664 = vmatpush1.msra.mxu0 0.0
  %665 = vmatprep.subr.mxu0 0.0
  %666 = vmatpush1.msra.mxu0 0.0
  %667 = vmatprep.subr.mxu0 0.0
  %668 = vmatpush1.msra.mxu0 0.0
  %669 = vmatprep.subr.mxu0 0.0
  %670 = vmatpush1.msra.mxu0 0.0
  %671 = vmatprep.subr.mxu0 0.0
  %672 = vmatpush1.msra.mxu0 0.0
  %673 = vmatprep.subr.mxu0 0.0
  %674 = vmatpush1.msra.mxu0 0.0
  %675 = vmatprep.subr.mxu0 0.0
  %676 = vmatpush1.msra.mxu0 0.0
  %677 = vmatprep.subr.mxu0 0.0
  %678 = vmatpush1.msra.mxu0 0.0
  %679 = vmatprep.subr.mxu0 0.0
  %680 = vmatpush1.msra.mxu0 0.0
  %681 = vmatprep.subr.mxu0 0.0
  %682 = vmatpush1.msra.mxu0 0.0
  %683 = vmatprep.subr.mxu0 0.0
  %684 = vmatpush1.msra.mxu0 0.0
  %685 = vmatprep.mubr.f32.mxu0 0.0
  %v686 = vand.u32 %v610, 4294901760
  %v687 = vsub.f32 %v610, %v686
  %v688 = vand.u32 %v687, 4294901760
  %v689 = vsub.f32 %v687, %v688
  %v690 = vand.u32 %v689, 4294901760
  %691 = vmatmul.mubr.f32.gmra.mrb[0].mxu0 %v690
  %v692 = vpop.f32.mrb[0].mxu0
  %v693 = vadd.f32 %v606, %v692
  %v694 = vpop.f32.mrb[0].mxu0
  %695 = vdwg.mxu0
  %696 = vmatprep.subr.mxu0 0.0
  %v697 = vand.u32 %v596, 4294901760
  %v698 = vsub.f32 %v596, %v697
  %v699 = vand.u32 %v698, 4294901760
  %v700 = vsub.f32 %v698, %v699
  %v701 = vand.u32 %v700, 4294901760
  %702 = vmatpush1.msra.mxu0 %v701
  %703 = vmatprep.subr.mxu0 0.0
  %v704 = vand.u32 %v597, 4294901760
  %v705 = vsub.f32 %v597, %v704
  %v706 = vand.u32 %v705, 4294901760
  %v707 = vsub.f32 %v705, %v706
  %v708 = vand.u32 %v707, 4294901760
  %709 = vmatpush1.msra.mxu0 %v708
  %710 = vmatprep.subr.mxu0 0.0
  %v711 = vand.u32 %v598, 4294901760
  %v712 = vsub.f32 %v598, %v711
  %v713 = vand.u32 %v712, 4294901760
  %v714 = vsub.f32 %v712, %v713
  %v715 = vand.u32 %v714, 4294901760
  %716 = vmatpush1.msra.mxu0 %v715
  %717 = vmatprep.subr.mxu0 0.0
  %v718 = vand.u32 %v599, 4294901760
  %v719 = vsub.f32 %v599, %v718
  %v720 = vand.u32 %v719, 4294901760
  %v721 = vsub.f32 %v719, %v720
  %v722 = vand.u32 %v721, 4294901760
  %723 = vmatpush1.msra.mxu0 %v722
  %724 = vmatprep.subr.mxu0 0.0
  %v725 = vand.u32 %v614, 4294901760
  %v726 = vsub.f32 %v614, %v725
  %v727 = vand.u32 %v726, 4294901760
  %v728 = vsub.f32 %v726, %v727
  %v729 = vand.u32 %v728, 4294901760
  %730 = vmatpush1.msra.mxu0 %v729
  %731 = vmatprep.subr.mxu0 0.0
  %732 = vmatpush1.msra.mxu0 0.0
  %733 = vmatprep.subr.mxu0 0.0
  %734 = vmatpush1.msra.mxu0 0.0
  %735 = vmatprep.subr.mxu0 0.0
  %736 = vmatpush1.msra.mxu0 0.0
  %737 = vmatprep.subr.mxu0 0.0
  %738 = vmatpush1.msra.mxu0 0.0
  %739 = vmatprep.subr.mxu0 0.0
  %740 = vmatpush1.msra.mxu0 0.0
  %741 = vmatprep.subr.mxu0 0.0
  %742 = vmatpush1.msra.mxu0 0.0
  %743 = vmatprep.subr.mxu0 0.0
  %744 = vmatpush1.msra.mxu0 0.0
  %745 = vmatprep.subr.mxu0 0.0
  %746 = vmatpush1.msra.mxu0 0.0
  %747 = vmatprep.subr.mxu0 0.0
  %748 = vmatpush1.msra.mxu0 0.0
  %749 = vmatprep.subr.mxu0 0.0
  %750 = vmatpush1.msra.mxu0 0.0
  %751 = vmatprep.subr.mxu0 0.0
  %752 = vmatpush1.msra.mxu0 0.0
  %753 = vmatprep.subr.mxu0 0.0
  %754 = vmatpush1.msra.mxu0 0.0
  %755 = vmatprep.subr.mxu0 0.0
  %756 = vmatpush1.msra.mxu0 0.0
  %757 = vmatprep.subr.mxu0 0.0
  %758 = vmatpush1.msra.mxu0 0.0
  %759 = vmatprep.subr.mxu0 0.0
  %760 = vmatpush1.msra.mxu0 0.0
  %761 = vmatprep.subr.mxu0 0.0
  %762 = vmatpush1.msra.mxu0 0.0
  %763 = vmatprep.subr.mxu0 0.0
  %764 = vmatpush1.msra.mxu0 0.0
  %765 = vmatprep.subr.mxu0 0.0
  %766 = vmatpush1.msra.mxu0 0.0
  %767 = vmatprep.subr.mxu0 0.0
  %768 = vmatpush1.msra.mxu0 0.0
  %769 = vmatprep.subr.mxu0 0.0
  %770 = vmatpush1.msra.mxu0 0.0
  %771 = vmatprep.subr.mxu0 0.0
  %772 = vmatpush1.msra.mxu0 0.0
  %773 = vmatprep.subr.mxu0 0.0
  %774 = vmatpush1.msra.mxu0 0.0
  %775 = vmatprep.subr.mxu0 0.0
  %776 = vmatpush1.msra.mxu0 0.0
  %777 = vmatprep.subr.mxu0 0.0
  %778 = vmatpush1.msra.mxu0 0.0
  %779 = vmatprep.subr.mxu0 0.0
  %780 = vmatpush1.msra.mxu0 0.0
  %781 = vmatprep.subr.mxu0 0.0
  %782 = vmatpush1.msra.mxu0 0.0
  %783 = vmatprep.subr.mxu0 0.0
  %784 = vmatpush1.msra.mxu0 0.0
  %785 = vmatprep.mubr.f32.mxu0 0.0
  %v786 = vand.u32 %v610, 4294901760
  %787 = vmatmul.mubr.f32.gmra.mrb[0].mxu0 %v786
  %v788 = vpop.f32.mrb[0].mxu0
  %v789 = vadd.f32 %v693, %v788
  %v790 = vpop.f32.mrb[0].mxu0
  %791 = vdwg.mxu0
  %792 = vmatprep.subr.mxu0 0.0
  %v793 = vand.u32 %v596, 4294901760
  %v794 = vsub.f32 %v596, %v793
  %795 = vmatpush1.msra.mxu0 %v794
  %796 = vmatprep.subr.mxu0 0.0
  %v797 = vand.u32 %v597, 4294901760
  %v798 = vsub.f32 %v597, %v797
  %799 = vmatpush1.msra.mxu0 %v798
  %800 = vmatprep.subr.mxu0 0.0
  %v801 = vand.u32 %v598, 4294901760
  %v802 = vsub.f32 %v598, %v801
  %803 = vmatpush1.msra.mxu0 %v802
  %804 = vmatprep.subr.mxu0 0.0
  %v805 = vand.u32 %v599, 4294901760
  %v806 = vsub.f32 %v599, %v805
  %807 = vmatpush1.msra.mxu0 %v806
  %808 = vmatprep.subr.mxu0 0.0
  %v809 = vand.u32 %v614, 4294901760
  %v810 = vsub.f32 %v614, %v809
  %811 = vmatpush1.msra.mxu0 %v810
  %812 = vmatprep.subr.mxu0 0.0
  %813 = vmatpush1.msra.mxu0 0.0
  %814 = vmatprep.subr.mxu0 0.0
  %815 = vmatpush1.msra.mxu0 0.0
  %816 = vmatprep.subr.mxu0 0.0
  %817 = vmatpush1.msra.mxu0 0.0
  %818 = vmatprep.subr.mxu0 0.0
  %819 = vmatpush1.msra.mxu0 0.0
  %820 = vmatprep.subr.mxu0 0.0
  %821 = vmatpush1.msra.mxu0 0.0
  %822 = vmatprep.subr.mxu0 0.0
  %823 = vmatpush1.msra.mxu0 0.0
  %824 = vmatprep.subr.mxu0 0.0
  %825 = vmatpush1.msra.mxu0 0.0
  %826 = vmatprep.subr.mxu0 0.0
  %827 = vmatpush1.msra.mxu0 0.0
  %828 = vmatprep.subr.mxu0 0.0
  %829 = vmatpush1.msra.mxu0 0.0
  %830 = vmatprep.subr.mxu0 0.0
  %831 = vmatpush1.msra.mxu0 0.0
  %832 = vmatprep.subr.mxu0 0.0
  %833 = vmatpush1.msra.mxu0 0.0
  %834 = vmatprep.subr.mxu0 0.0
  %835 = vmatpush1.msra.mxu0 0.0
  %836 = vmatprep.subr.mxu0 0.0
  %837 = vmatpush1.msra.mxu0 0.0
  %838 = vmatprep.subr.mxu0 0.0
  %839 = vmatpush1.msra.mxu0 0.0
  %840 = vmatprep.subr.mxu0 0.0
  %841 = vmatpush1.msra.mxu0 0.0
  %842 = vmatprep.subr.mxu0 0.0
  %843 = vmatpush1.msra.mxu0 0.0
  %844 = vmatprep.subr.mxu0 0.0
  %845 = vmatpush1.msra.mxu0 0.0
  %846 = vmatprep.subr.mxu0 0.0
  %847 = vmatpush1.msra.mxu0 0.0
  %848 = vmatprep.subr.mxu0 0.0
  %849 = vmatpush1.msra.mxu0 0.0
  %850 = vmatprep.subr.mxu0 0.0
  %851 = vmatpush1.msra.mxu0 0.0
  %852 = vmatprep.subr.mxu0 0.0
  %853 = vmatpush1.msra.mxu0 0.0
  %854 = vmatprep.subr.mxu0 0.0
  %855 = vmatpush1.msra.mxu0 0.0
  %856 = vmatprep.subr.mxu0 0.0
  %857 = vmatpush1.msra.mxu0 0.0
  %858 = vmatprep.subr.mxu0 0.0
  %859 = vmatpush1.msra.mxu0 0.0
  %860 = vmatprep.subr.mxu0 0.0
  %861 = vmatpush1.msra.mxu0 0.0
  %862 = vmatprep.subr.mxu0 0.0
  %863 = vmatpush1.msra.mxu0 0.0
  %864 = vmatprep.subr.mxu0 0.0
  %865 = vmatpush1.msra.mxu0 0.0
  %866 = vmatprep.mubr.f32.mxu0 0.0
  %v867 = vand.u32 %v610, 4294901760
  %v868 = vsub.f32 %v610, %v867
  %869 = vmatmul.mubr.f32.gmra.mrb[0].mxu0 %v868
  %v870 = vpop.f32.mrb[0].mxu0
  %v871 = vadd.f32 %v789, %v870
  %v872 = vpop.f32.mrb[0].mxu0
  %873 = vdwg.mxu0
  %874 = vmatprep.subr.mxu0 0.0
  %v875 = vand.u32 %v596, 4294901760
  %876 = vmatpush1.msra.mxu0 %v875
  %877 = vmatprep.subr.mxu0 0.0
  %v878 = vand.u32 %v597, 4294901760
  %879 = vmatpush1.msra.mxu0 %v878
  %880 = vmatprep.subr.mxu0 0.0
  %v881 = vand.u32 %v598, 4294901760
  %882 = vmatpush1.msra.mxu0 %v881
  %883 = vmatprep.subr.mxu0 0.0
  %v884 = vand.u32 %v599, 4294901760
  %885 = vmatpush1.msra.mxu0 %v884
  %886 = vmatprep.subr.mxu0 0.0
  %v887 = vand.u32 %v614, 4294901760
  %888 = vmatpush1.msra.mxu0 %v887
  %889 = vmatprep.subr.mxu0 0.0
  %890 = vmatpush1.msra.mxu0 0.0
  %891 = vmatprep.subr.mxu0 0.0
  %892 = vmatpush1.msra.mxu0 0.0
  %893 = vmatprep.subr.mxu0 0.0
  %894 = vmatpush1.msra.mxu0 0.0
  %895 = vmatprep.subr.mxu0 0.0
  %896 = vmatpush1.msra.mxu0 0.0
  %897 = vmatprep.subr.mxu0 0.0
  %898 = vmatpush1.msra.mxu0 0.0
  %899 = vmatprep.subr.mxu0 0.0
  %900 = vmatpush1.msra.mxu0 0.0
  %901 = vmatprep.subr.mxu0 0.0
  %902 = vmatpush1.msra.mxu0 0.0
  %903 = vmatprep.subr.mxu0 0.0
  %904 = vmatpush1.msra.mxu0 0.0
  %905 = vmatprep.subr.mxu0 0.0
  %906 = vmatpush1.msra.mxu0 0.0
  %907 = vmatprep.subr.mxu0 0.0
  %908 = vmatpush1.msra.mxu0 0.0
  %909 = vmatprep.subr.mxu0 0.0
  %910 = vmatpush1.msra.mxu0 0.0
  %911 = vmatprep.subr.mxu0 0.0
  %912 = vmatpush1.msra.mxu0 0.0
  %913 = vmatprep.subr.mxu0 0.0
  %914 = vmatpush1.msra.mxu0 0.0
  %915 = vmatprep.subr.mxu0 0.0
  %916 = vmatpush1.msra.mxu0 0.0
  %917 = vmatprep.subr.mxu0 0.0
  %918 = vmatpush1.msra.mxu0 0.0
  %919 = vmatprep.subr.mxu0 0.0
  %920 = vmatpush1.msra.mxu0 0.0
  %921 = vmatprep.subr.mxu0 0.0
  %922 = vmatpush1.msra.mxu0 0.0
  %923 = vmatprep.subr.mxu0 0.0
  %924 = vmatpush1.msra.mxu0 0.0
  %925 = vmatprep.subr.mxu0 0.0
  %926 = vmatpush1.msra.mxu0 0.0
  %927 = vmatprep.subr.mxu0 0.0
  %928 = vmatpush1.msra.mxu0 0.0
  %929 = vmatprep.subr.mxu0 0.0
  %930 = vmatpush1.msra.mxu0 0.0
  %931 = vmatprep.subr.mxu0 0.0
  %932 = vmatpush1.msra.mxu0 0.0
  %933 = vmatprep.subr.mxu0 0.0
  %934 = vmatpush1.msra.mxu0 0.0
  %935 = vmatprep.subr.mxu0 0.0
  %936 = vmatpush1.msra.mxu0 0.0
  %937 = vmatprep.subr.mxu0 0.0
  %938 = vmatpush1.msra.mxu0 0.0
  %939 = vmatprep.subr.mxu0 0.0
  %940 = vmatpush1.msra.mxu0 0.0
  %941 = vmatprep.subr.mxu0 0.0
  %942 = vmatpush1.msra.mxu0 0.0
  %943 = vmatprep.mubr.f32.mxu0 0.0
  %v944 = vand.u32 %v610, 4294901760
  %v945 = vsub.f32 %v610, %v944
  %v946 = vand.u32 %v945, 4294901760
  %947 = vmatmul.mubr.f32.gmra.mrb[0].mxu0 %v946
  %v948 = vpop.f32.mrb[0].mxu0
  %v949 = vadd.f32 %v871, %v948
  %v950 = vpop.f32.mrb[0].mxu0
  %951 = vdwg.mxu0
  %952 = vmatprep.subr.mxu0 0.0
  %v953 = vand.u32 %v596, 4294901760
  %v954 = vsub.f32 %v596, %v953
  %v955 = vand.u32 %v954, 4294901760
  %956 = vmatpush1.msra.mxu0 %v955
  %957 = vmatprep.subr.mxu0 0.0
  %v958 = vand.u32 %v597, 4294901760
  %v959 = vsub.f32 %v597, %v958
  %v960 = vand.u32 %v959, 4294901760
  %961 = vmatpush1.msra.mxu0 %v960
  %962 = vmatprep.subr.mxu0 0.0
  %v963 = vand.u32 %v598, 4294901760
  %v964 = vsub.f32 %v598, %v963
  %v965 = vand.u32 %v964, 4294901760
  %966 = vmatpush1.msra.mxu0 %v965
  %967 = vmatprep.subr.mxu0 0.0
  %v968 = vand.u32 %v599, 4294901760
  %v969 = vsub.f32 %v599, %v968
  %v970 = vand.u32 %v969, 4294901760
  %971 = vmatpush1.msra.mxu0 %v970
  %972 = vmatprep.subr.mxu0 0.0
  %v973 = vand.u32 %v614, 4294901760
  %v974 = vsub.f32 %v614, %v973
  %v975 = vand.u32 %v974, 4294901760
  %976 = vmatpush1.msra.mxu0 %v975
  %977 = vmatprep.subr.mxu0 0.0
  %978 = vmatpush1.msra.mxu0 0.0
  %979 = vmatprep.subr.mxu0 0.0
  %980 = vmatpush1.msra.mxu0 0.0
  %981 = vmatprep.subr.mxu0 0.0
  %982 = vmatpush1.msra.mxu0 0.0
  %983 = vmatprep.subr.mxu0 0.0
  %984 = vmatpush1.msra.mxu0 0.0
  %985 = vmatprep.subr.mxu0 0.0
  %986 = vmatpush1.msra.mxu0 0.0
  %987 = vmatprep.subr.mxu0 0.0
  %988 = vmatpush1.msra.mxu0 0.0
  %989 = vmatprep.subr.mxu0 0.0
  %990 = vmatpush1.msra.mxu0 0.0
  %991 = vmatprep.subr.mxu0 0.0
  %992 = vmatpush1.msra.mxu0 0.0
  %993 = vmatprep.subr.mxu0 0.0
  %994 = vmatpush1.msra.mxu0 0.0
  %995 = vmatprep.subr.mxu0 0.0
  %996 = vmatpush1.msra.mxu0 0.0
  %997 = vmatprep.subr.mxu0 0.0
  %998 = vmatpush1.msra.mxu0 0.0
  %999 = vmatprep.subr.mxu0 0.0
  %1000 = vmatpush1.msra.mxu0 0.0
  %1001 = vmatprep.subr.mxu0 0.0
  %1002 = vmatpush1.msra.mxu0 0.0
  %1003 = vmatprep.subr.mxu0 0.0
  %1004 = vmatpush1.msra.mxu0 0.0
  %1005 = vmatprep.subr.mxu0 0.0
  %1006 = vmatpush1.msra.mxu0 0.0
  %1007 = vmatprep.subr.mxu0 0.0
  %1008 = vmatpush1.msra.mxu0 0.0
  %1009 = vmatprep.subr.mxu0 0.0
  %1010 = vmatpush1.msra.mxu0 0.0
  %1011 = vmatprep.subr.mxu0 0.0
  %1012 = vmatpush1.msra.mxu0 0.0
  %1013 = vmatprep.subr.mxu0 0.0
  %1014 = vmatpush1.msra.mxu0 0.0
  %1015 = vmatprep.subr.mxu0 0.0
  %1016 = vmatpush1.msra.mxu0 0.0
  %1017 = vmatprep.subr.mxu0 0.0
  %1018 = vmatpush1.msra.mxu0 0.0
  %1019 = vmatprep.subr.mxu0 0.0
  %1020 = vmatpush1.msra.mxu0 0.0
  %1021 = vmatprep.subr.mxu0 0.0
  %1022 = vmatpush1.msra.mxu0 0.0
  %1023 = vmatprep.subr.mxu0 0.0
  %1024 = vmatpush1.msra.mxu0 0.0
  %1025 = vmatprep.subr.mxu0 0.0
  %1026 = vmatpush1.msra.mxu0 0.0
  %1027 = vmatprep.subr.mxu0 0.0
  %1028 = vmatpush1.msra.mxu0 0.0
  %1029 = vmatprep.subr.mxu0 0.0
  %1030 = vmatpush1.msra.mxu0 0.0
  %1031 = vmatprep.mubr.f32.mxu0 0.0
  %v1032 = vand.u32 %v610, 4294901760
  %1033 = vmatmul.mubr.f32.gmra.mrb[0].mxu0 %v1032
  %v1034 = vpop.f32.mrb[0].mxu0
  %v1035 = vadd.f32 %v949, %v1034
  %v1036 = vpop.f32.mrb[0].mxu0
  %1037 = vdwg.mxu0
  %1038 = vmatprep.subr.mxu0 0.0
  %v1039 = vand.u32 %v596, 4294901760
  %1040 = vmatpush1.msra.mxu0 %v1039
  %1041 = vmatprep.subr.mxu0 0.0
  %v1042 = vand.u32 %v597, 4294901760
  %1043 = vmatpush1.msra.mxu0 %v1042
  %1044 = vmatprep.subr.mxu0 0.0
  %v1045 = vand.u32 %v598, 4294901760
  %1046 = vmatpush1.msra.mxu0 %v1045
  %1047 = vmatprep.subr.mxu0 0.0
  %v1048 = vand.u32 %v599, 4294901760
  %1049 = vmatpush1.msra.mxu0 %v1048
  %1050 = vmatprep.subr.mxu0 0.0
  %v1051 = vand.u32 %v614, 4294901760
  %1052 = vmatpush1.msra.mxu0 %v1051
  %1053 = vmatprep.subr.mxu0 0.0
  %1054 = vmatpush1.msra.mxu0 0.0
  %1055 = vmatprep.subr.mxu0 0.0
  %1056 = vmatpush1.msra.mxu0 0.0
  %1057 = vmatprep.subr.mxu0 0.0
  %1058 = vmatpush1.msra.mxu0 0.0
  %1059 = vmatprep.subr.mxu0 0.0
  %1060 = vmatpush1.msra.mxu0 0.0
  %1061 = vmatprep.subr.mxu0 0.0
  %1062 = vmatpush1.msra.mxu0 0.0
  %1063 = vmatprep.subr.mxu0 0.0
  %1064 = vmatpush1.msra.mxu0 0.0
  %1065 = vmatprep.subr.mxu0 0.0
  %1066 = vmatpush1.msra.mxu0 0.0
  %1067 = vmatprep.subr.mxu0 0.0
  %1068 = vmatpush1.msra.mxu0 0.0
  %1069 = vmatprep.subr.mxu0 0.0
  %1070 = vmatpush1.msra.mxu0 0.0
  %1071 = vmatprep.subr.mxu0 0.0
  %1072 = vmatpush1.msra.mxu0 0.0
  %1073 = vmatprep.subr.mxu0 0.0
  %1074 = vmatpush1.msra.mxu0 0.0
  %1075 = vmatprep.subr.mxu0 0.0
  %1076 = vmatpush1.msra.mxu0 0.0
  %1077 = vmatprep.subr.mxu0 0.0
  %1078 = vmatpush1.msra.mxu0 0.0
  %1079 = vmatprep.subr.mxu0 0.0
  %1080 = vmatpush1.msra.mxu0 0.0
  %1081 = vmatprep.subr.mxu0 0.0
  %1082 = vmatpush1.msra.mxu0 0.0
  %1083 = vmatprep.subr.mxu0 0.0
  %1084 = vmatpush1.msra.mxu0 0.0
  %1085 = vmatprep.subr.mxu0 0.0
  %1086 = vmatpush1.msra.mxu0 0.0
  %1087 = vmatprep.subr.mxu0 0.0
  %1088 = vmatpush1.msra.mxu0 0.0
  %1089 = vmatprep.subr.mxu0 0.0
  %1090 = vmatpush1.msra.mxu0 0.0
  %1091 = vmatprep.subr.mxu0 0.0
  %1092 = vmatpush1.msra.mxu0 0.0
  %1093 = vmatprep.subr.mxu0 0.0
  %1094 = vmatpush1.msra.mxu0 0.0
  %1095 = vmatprep.subr.mxu0 0.0
  %1096 = vmatpush1.msra.mxu0 0.0
  %1097 = vmatprep.subr.mxu0 0.0
  %1098 = vmatpush1.msra.mxu0 0.0
  %1099 = vmatprep.subr.mxu0 0.0
  %1100 = vmatpush1.msra.mxu0 0.0
  %1101 = vmatprep.subr.mxu0 0.0
  %1102 = vmatpush1.msra.mxu0 0.0
  %1103 = vmatprep.subr.mxu0 0.0
  %1104 = vmatpush1.msra.mxu0 0.0
  %1105 = vmatprep.subr.mxu0 0.0
  %1106 = vmatpush1.msra.mxu0 0.0
  %1107 = vmatprep.mubr.f32.mxu0 0.0
  %v1108 = vand.u32 %v610, 4294901760
  %1109 = vmatmul.mubr.f32.gmra.mrb[0].mxu0 %v1108
  %v1110 = vpop.f32.mrb[0].mxu0
  %v1111 = vadd.f32 %v1035, %v1110
  %v1112 = vpop.f32.mrb[0].mxu0
  %1113 = vdwg.mxu0
  %vm1114 = vcmask 7168
  %1115 = vst.msk [vmem:[%s5] sm:$0xff] %vm1114, %v1111
  // Predicated region
  $region22: #{baonet_forward.1} parent=0 // pred_check
    _
  $region23: #{baonet_forward.1} parent=0 // pred_check_branch
    %1117 = sbr.rel (0) target = $region25
  $region24: #{baonet_forward.1} parent=0 // pred_region
    _
  $region25: #{baonet_forward.1} parent=0 // pred_fallthru
    _
  // Predicated region
  $region26: #{baonet_forward.1} parent=0 // pred_check
    _
  $region27: #{baonet_forward.1} parent=0 // pred_check_branch
    %1119 = sbr.rel (0) target = $region29
  $region28: #{baonet_forward.1} parent=0 // pred_region
    _
  $region29: #{baonet_forward.1} parent=0 // pred_fallthru
    _

</llo_original>
